<compile_context>
chip_gen: v5e
topology: v5e:2x2
jax: 0.10.0
libtpu: 0.0.40
codegen_flags: <defaults>
</compile_context>

<pallas_src>
import functools
import math

import jax
import jax.numpy as jnp
from jax.experimental import pallas as pl
from jax.experimental.pallas import tpu as pltpu


_H1 = 32   # fc1 out features
_H2 = 8    # fc2 / lin1 out features
_OUT = 2   # lin2 out features


def _leaky_relu(v, slope=0.2):
    return jnp.where(v >= 0, v, slope * v)


def _packing_factor(input_dim, n_nodes):
    """How many node rows share one 128-lane register after packing."""
    if 128 % input_dim == 0:
        return max(1, math.gcd(128 // input_dim, n_nodes))
    return 1


def _vmem_limit_bytes():
    """Per-generation scoped-VMEM budget (v7x 64 MiB/TC, v5e/v6e 128 MiB)."""
    try:
        cap = pltpu.get_tpu_info().vmem_capacity_bytes
    except Exception:
        cap = 64 * 1024 * 1024          # conservative v7x per-TC figure
    return min(int(cap * 0.75), 100 * 1024 * 1024)


def _max_packed_rows(vmem_limit, pack, input_dim):
    """Largest packed-row tile keeping x (multi-buffered) + intermediates
    comfortably inside the scoped VMEM budget."""
    lane = pack * input_dim
    per_row = (3 * lane * 4             # f32 x tile, up to triple-buffered
               + lane * 2               # in-kernel bf16 copy of the x tile
               + pack * _H1 * (4 + 2)   # h (f32) + bf16 copy for the fc2 dot
               + pack * _H2 * 4)        # h2 (f32)
    budget = int(vmem_limit * 0.6)      # headroom for weights/out/scratch
    return max(8, min(budget // per_row, 256 * 1024))


def _choose_tile_graphs(batch_size, rows_per_graph, max_rows):
    """Largest 128-aligned divisor of batch_size whose row tile fits VMEM,
    preferring >= 2 grid steps (v7x megacore).  Falls back to the full batch
    in a single (always shape-legal) tile."""
    cands = [d for d in range(128, batch_size + 1, 128)
             if batch_size % d == 0 and d * rows_per_graph <= max_rows]
    if not cands:
        return batch_size
    multi = [d for d in cands if batch_size // d >= 2]
    return max(multi) if multi else max(cands)


def _block_diag(w, p):
    return w if p == 1 else jnp.kron(jnp.eye(p, dtype=w.dtype), w)


def _pack_params(params, pack, scale):
    """Block-diagonal bf16 W1/W2 (so `pack` node rows share the lanes), a small
    f32 slab [pool-sum | lin1 | lin2(padded)] and a bias slab."""
    w1, b1, w2, b2, w3, b3, w4, b4 = params
    f32 = jnp.float32
    w1_bd = _block_diag(w1.astype(f32), pack).astype(jnp.bfloat16)    # [p*in, p*32]
    w2_bd = _block_diag(w2.astype(f32), pack).astype(jnp.bfloat16)    # [p*32, p*8]
    # Pool matrix: sums the `pack` 8-wide lane blocks; mean scale folded in.
    s = jnp.tile(jnp.eye(_H2, dtype=f32), (pack, 1)) * scale           # [p*8, 8]
    w4p = jnp.pad(w4.astype(f32), ((0, 0), (0, _H2 - w4.shape[1])))    # [8, 8]
    small = jnp.concatenate([s, w3.astype(f32), w4p], axis=0)          # [p*8+16, 8]
    width = pack * _H1

    def row(b):
        b = b.reshape(1, -1).astype(f32)
        return jnp.pad(b, ((0, 0), (0, width - b.shape[1])))

    b_all = jnp.concatenate(
        [row(jnp.tile(b1.reshape(1, -1), (1, pack))),                  # b1 tiled
         row(jnp.tile(b2.reshape(1, -1), (1, pack))),                  # b2 tiled
         row(b3), row(b4)], axis=0)                                    # [4, p*32]
    return w1_bd, w2_bd, small, b_all


def _make_kernel(tile_graphs, rows_per_graph, pack):
    l1 = pack * _H1
    l2 = pack * _H2

    def kernel(x_ref, w1_ref, w2_ref, small_ref, bias_ref, out_ref):
        # fc1: lane-packed bf16 x block-diagonal bf16 -> f32 acc, f32 epilogue
        xb = x_ref[...].astype(jnp.bfloat16)
        h = jnp.dot(xb, w1_ref[...], preferred_element_type=jnp.float32)
        h = _leaky_relu(h + bias_ref[0:1, 0:l1])               # [TM, p*32] f32
        # fc2: bf16 keeps the largest intermediate half-size and MXU-native
        h = h.astype(jnp.bfloat16)
        h2 = jnp.dot(h, w2_ref[...], preferred_element_type=jnp.float32)
        h2 = _leaky_relu(h2 + bias_ref[1:2, 0:l2])             # [TM, p*8] f32
        # node pool: per-graph row sum (if any), then sum the `pack` 8-wide
        # lane blocks via a tiny MXU matmul (mean scale folded into S).
        if rows_per_graph > 1:
            h2 = h2.reshape(tile_graphs, rows_per_graph, l2).sum(axis=1)
        pooled = jnp.dot(h2, small_ref[0:l2, :],
                         preferred_element_type=jnp.float32)   # [TG, 8]
        # lin1 + leaky_relu
        g = jnp.dot(pooled, small_ref[l2:l2 + _H2, :],
                    preferred_element_type=jnp.float32)
        g = _leaky_relu(g + bias_ref[2:3, 0:_H2])              # [TG, 8]
        # TODO(synk): F.dropout(p=0.5) is identity in eval mode; training-mode
        # dropout would need pltpu.prng_seed / pltpu.prng_random_bits masking.
        # lin2 (weights zero-padded to 8 output lanes, slice the 2 real ones)
        out = jnp.dot(g, small_ref[l2 + _H2:l2 + 2 * _H2, :],
                      preferred_element_type=jnp.float32)      # [TG, 8]
        out = out[:, 0:_OUT] + bias_ref[3:4, 0:_OUT]           # [TG, 2]
        out_ref[...] = out.T                                   # lane-dense [2, TG]
    return kernel


@functools.partial(jax.jit, static_argnames=("batch_size", "pool"))
def mlp_forward(x, params, *, batch_size, pool="mean"):
    n_rows, input_dim = x.shape
    assert n_rows % batch_size == 0, "rows must be batch_size * n_nodes (contiguous)"
    n_nodes = n_rows // batch_size
    scale = (1.0 / n_nodes) if pool == "mean" else 1.0

    pack = _packing_factor(input_dim, n_nodes)
    rows_per_graph = n_nodes // pack            # packed rows per graph
    lane = pack * input_dim

    vmem_limit = _vmem_limit_bytes()
    max_rows = _max_packed_rows(vmem_limit, pack, input_dim)
    tg = _choose_tile_graphs(batch_size, rows_per_graph, max_rows)
    tm = tg * rows_per_graph                    # packed rows per grid step
    grid_len = batch_size // tg

    w1_bd, w2_bd, small, b_all = _pack_params(params, pack, scale)
    # Free, contiguous reshape: `pack` node rows share one lane-dense row.
    # x stays f32 -> no extra wrapper-side HBM pass; cast to bf16 in-kernel.
    x_packed = x.reshape(n_rows // pack, lane)

    x_spec_kwargs = {}
    if grid_len >= 3:
        # Third buffer hides DMA issue/writeback jitter on the single stream.
        x_spec_kwargs["pipeline_mode"] = pl.Buffered(3)

    kernel = _make_kernel(tg, rows_per_graph, pack)
    out_t = pl.pallas_call(
        kernel,
        out_shape=jax.ShapeDtypeStruct((_OUT, batch_size), jnp.float32),
        grid_spec=pltpu.PrefetchScalarGridSpec(
            num_scalar_prefetch=0,
            grid=(grid_len,),
            in_specs=[
                pl.BlockSpec((tm, lane), lambda i: (i, 0), **x_spec_kwargs),
                pl.BlockSpec(w1_bd.shape, lambda i: (0, 0)),   # resident
                pl.BlockSpec(w2_bd.shape, lambda i: (0, 0)),   # resident
                pl.BlockSpec(small.shape, lambda i: (0, 0)),   # resident
                pl.BlockSpec(b_all.shape, lambda i: (0, 0)),   # resident
            ],
            out_specs=pl.BlockSpec((_OUT, tg), lambda i: (0, i)),  # lane-dense
        ),
        compiler_params=pltpu.CompilerParams(
            dimension_semantics=("parallel",),      # v7x: shard rows over 2 TCs
            vmem_limit_bytes=vmem_limit,            # per-generation budget
        ),
    )(x_packed, w1_bd, w2_bd, small, b_all)
    return out_t.T   # [batch_size, 2]


def init_params(key, input_dim):
    ks = jax.random.split(key, 8)

    def lin(kw, kb, fan_in, fan_out):
        bound = 1.0 / jnp.sqrt(fan_in)
        w = jax.random.uniform(kw, (fan_in, fan_out), jnp.float32, -bound, bound)
        b = jax.random.uniform(kb, (1, fan_out), jnp.float32, -bound, bound)
        return w, b

    w1, b1 = lin(ks[0], ks[1], input_dim, _H1)
    w2, b2 = lin(ks[2], ks[3], _H1, _H2)
    w3, b3 = lin(ks[4], ks[5], _H2, _H2)
    w4, b4 = lin(ks[6], ks[7], _H2, _OUT)
    return (w1, b1, w2, b2, w3, b3, w4, b4)


def mlp_reference(x, params, batch_size, pool="mean"):
    (w1, b1, w2, b2, w3, b3, w4, b4) = params
    f32 = jnp.float32
    # Match the kernel's bf16 storage of the x/W1 stream and of h/W2.
    xf = x.astype(jnp.bfloat16).astype(f32)
    w1f = w1.astype(jnp.bfloat16).astype(f32)
    w2f = w2.astype(jnp.bfloat16).astype(f32)
    h = _leaky_relu(xf @ w1f + b1)
    h = h.astype(jnp.bfloat16).astype(f32)
    h = _leaky_relu(h @ w2f + b2)
    h = h.reshape(batch_size, -1, _H2)
    h = jnp.mean(h, axis=1) if pool == "mean" else jnp.sum(h, axis=1)
    g = _leaky_relu(h @ w3 + b3)
    # dropout(p=0.5) is identity in eval mode
    return g @ w4 + b4


if __name__ == "__main__":
    key = jax.random.PRNGKey(0)
    k_x, k_p, k_x2 = jax.random.split(key, 3)

    input_dim = 16
    params = init_params(k_p, input_dim)

    # Small shape matching the module's forward(x, batch_size) contract.
    batch_size, n_nodes = 2, 8
    x = jax.random.normal(k_x, (batch_size * n_nodes, input_dim), jnp.float32)
    out = jax.block_until_ready(mlp_forward(x, params, batch_size=batch_size, pool="mean"))
    ref = mlp_reference(x, params, batch_size, pool="mean")
    assert out.shape == (batch_size, _OUT)
    assert jnp.allclose(out, ref, atol=2e-3, rtol=2e-3), (out, ref)

    # Also exercise the multi-tile (grid >= 2), lane-aligned output path.
    batch_size2 = 256
    x2 = jax.random.normal(k_x2, (batch_size2 * n_nodes, input_dim), jnp.float32)
    out2 = jax.block_until_ready(mlp_forward(x2, params, batch_size=batch_size2, pool="mean"))
    ref2 = mlp_reference(x2, params, batch_size2, pool="mean")
    assert out2.shape == (batch_size2, _OUT)
    assert jnp.allclose(out2, ref2, atol=2e-3, rtol=2e-3)

    print("KERNEL_OK")
</pallas_src>

<mosaic_0001>
module attributes {stable_mosaic.version = 11 : i64} {
  func.func @kernel(%arg0: i32, %arg1: memref<2x128xf32, #tpu.memory_space<vmem>>, %arg2: memref<128x256xbf16, #tpu.memory_space<vmem>>, %arg3: memref<256x64xbf16, #tpu.memory_space<vmem>>, %arg4: memref<80x8xf32, #tpu.memory_space<vmem>>, %arg5: memref<4x256xf32, #tpu.memory_space<vmem>>, %arg6: memref<2x2xf32, #tpu.memory_space<vmem>>) attributes {dimension_semantics = [#tpu.dimension_semantics<parallel>], iteration_bounds = array<i64: 1>, scalar_prefetch = 0 : i64, scratch_operands = 0 : i64, tpu.core_type = #tpu.core_type<tc>, window_params = [{transform_indices = @transform_0, window_bounds = array<i64: 2, 128>}, {pipeline_mode = #tpu.pipeline_mode<synchronous>, transform_indices = @transform_1, window_bounds = array<i64: 128, 256>}, {pipeline_mode = #tpu.pipeline_mode<synchronous>, transform_indices = @transform_2, window_bounds = array<i64: 256, 64>}, {pipeline_mode = #tpu.pipeline_mode<synchronous>, transform_indices = @transform_3, window_bounds = array<i64: 80, 8>}, {pipeline_mode = #tpu.pipeline_mode<synchronous>, transform_indices = @transform_4, window_bounds = array<i64: 4, 256>}, {transform_indices = @transform_5, window_bounds = array<i64: 2, 2>}]} {
    %c0 = arith.constant 0 : index
    %c0_0 = arith.constant 0 : index
    %0 = vector.load %arg1[%c0, %c0_0] : memref<2x128xf32, #tpu.memory_space<vmem>>, vector<2x128xf32>
    %1 = arith.truncf %0 : vector<2x128xf32> to vector<2x128xbf16>
    %c0_1 = arith.constant 0 : index
    %c0_2 = arith.constant 0 : index
    %2 = vector.load %arg2[%c0_1, %c0_2] : memref<128x256xbf16, #tpu.memory_space<vmem>>, vector<128x256xbf16>
    %cst = arith.constant dense<0.000000e+00> : vector<2x256xf32>
    %3 = tpu.matmul %1, %2, %cst {dimension_numbers = #tpu.dot_dimension_numbers<[1], [0], [0], [1], [0, 0, 1, 1], [], []>} : vector<2x128xbf16>, vector<128x256xbf16>, vector<2x256xf32> -> vector<2x256xf32>
    %c0_3 = arith.constant 0 : index
    %c0_4 = arith.constant 0 : index
    %4 = vector.load %arg5[%c0_3, %c0_4] : memref<4x256xf32, #tpu.memory_space<vmem>>, vector<1x256xf32>
    %5 = vector.broadcast %4 : vector<1x256xf32> to vector<2x256xf32>
    %6 = arith.addf %3, %5 : vector<2x256xf32>
    %cst_5 = arith.constant 0.000000e+00 : f32
    %7 = vector.broadcast %cst_5 : f32 to vector<2x256xf32>
    %8 = arith.cmpf oge, %6, %7 : vector<2x256xf32>
    %cst_6 = arith.constant 2.000000e-01 : f32
    %9 = vector.broadcast %cst_6 : f32 to vector<2x256xf32>
    %10 = arith.mulf %9, %6 : vector<2x256xf32>
    %11 = arith.select %8, %6, %10 : vector<2x256xi1>, vector<2x256xf32>
    %12 = arith.truncf %11 : vector<2x256xf32> to vector<2x256xbf16>
    %c0_7 = arith.constant 0 : index
    %c0_8 = arith.constant 0 : index
    %13 = vector.load %arg3[%c0_7, %c0_8] : memref<256x64xbf16, #tpu.memory_space<vmem>>, vector<256x64xbf16>
    %cst_9 = arith.constant dense<0.000000e+00> : vector<2x64xf32>
    %14 = tpu.matmul %12, %13, %cst_9 {dimension_numbers = #tpu.dot_dimension_numbers<[1], [0], [0], [1], [0, 0, 1, 1], [], []>} : vector<2x256xbf16>, vector<256x64xbf16>, vector<2x64xf32> -> vector<2x64xf32>
    %c1 = arith.constant 1 : index
    %c0_10 = arith.constant 0 : index
    %15 = vector.load %arg5[%c1, %c0_10] : memref<4x256xf32, #tpu.memory_space<vmem>>, vector<1x64xf32>
    %16 = vector.broadcast %15 : vector<1x64xf32> to vector<2x64xf32>
    %17 = arith.addf %14, %16 : vector<2x64xf32>
    %cst_11 = arith.constant 0.000000e+00 : f32
    %18 = vector.broadcast %cst_11 : f32 to vector<2x64xf32>
    %19 = arith.cmpf oge, %17, %18 : vector<2x64xf32>
    %cst_12 = arith.constant 2.000000e-01 : f32
    %20 = vector.broadcast %cst_12 : f32 to vector<2x64xf32>
    %21 = arith.mulf %20, %17 : vector<2x64xf32>
    %22 = arith.select %19, %17, %21 : vector<2x64xi1>, vector<2x64xf32>
    %c0_13 = arith.constant 0 : index
    %c0_14 = arith.constant 0 : index
    %23 = vector.load %arg4[%c0_13, %c0_14] : memref<80x8xf32, #tpu.memory_space<vmem>>, vector<64x8xf32>
    %cst_15 = arith.constant dense<0.000000e+00> : vector<2x8xf32>
    %24 = tpu.matmul %22, %23, %cst_15 {dimension_numbers = #tpu.dot_dimension_numbers<[1], [0], [0], [1], [0, 0, 1, 1], [], []>} : vector<2x64xf32>, vector<64x8xf32>, vector<2x8xf32> -> vector<2x8xf32>
    %c64 = arith.constant 64 : index
    %c0_16 = arith.constant 0 : index
    %25 = vector.load %arg4[%c64, %c0_16] : memref<80x8xf32, #tpu.memory_space<vmem>>, vector<8x8xf32>
    %cst_17 = arith.constant dense<0.000000e+00> : vector<2x8xf32>
    %26 = tpu.matmul %24, %25, %cst_17 {dimension_numbers = #tpu.dot_dimension_numbers<[1], [0], [0], [1], [0, 0, 1, 1], [], []>} : vector<2x8xf32>, vector<8x8xf32>, vector<2x8xf32> -> vector<2x8xf32>
    %c2 = arith.constant 2 : index
    %c0_18 = arith.constant 0 : index
    %27 = vector.load %arg5[%c2, %c0_18] : memref<4x256xf32, #tpu.memory_space<vmem>>, vector<1x8xf32>
    %28 = vector.broadcast %27 : vector<1x8xf32> to vector<2x8xf32>
    %29 = arith.addf %26, %28 : vector<2x8xf32>
    %cst_19 = arith.constant 0.000000e+00 : f32
    %30 = vector.broadcast %cst_19 : f32 to vector<2x8xf32>
    %31 = arith.cmpf oge, %29, %30 : vector<2x8xf32>
    %cst_20 = arith.constant 2.000000e-01 : f32
    %32 = vector.broadcast %cst_20 : f32 to vector<2x8xf32>
    %33 = arith.mulf %32, %29 : vector<2x8xf32>
    %34 = arith.select %31, %29, %33 : vector<2x8xi1>, vector<2x8xf32>
    %c72 = arith.constant 72 : index
    %c0_21 = arith.constant 0 : index
    %35 = vector.load %arg4[%c72, %c0_21] : memref<80x8xf32, #tpu.memory_space<vmem>>, vector<8x8xf32>
    %cst_22 = arith.constant dense<0.000000e+00> : vector<2x8xf32>
    %36 = tpu.matmul %34, %35, %cst_22 {dimension_numbers = #tpu.dot_dimension_numbers<[1], [0], [0], [1], [0, 0, 1, 1], [], []>} : vector<2x8xf32>, vector<8x8xf32>, vector<2x8xf32> -> vector<2x8xf32>
    %37 = vector.extract_strided_slice %36 {offsets = [0, 0], sizes = [2, 2], strides = [1, 1]} : vector<2x8xf32> to vector<2x2xf32>
    %c3 = arith.constant 3 : index
    %c0_23 = arith.constant 0 : index
    %38 = vector.load %arg5[%c3, %c0_23] : memref<4x256xf32, #tpu.memory_space<vmem>>, vector<1x2xf32>
    %39 = vector.broadcast %38 : vector<1x2xf32> to vector<2x2xf32>
    %40 = arith.addf %37, %39 : vector<2x2xf32>
    %41 = tpu.transpose %40, [1, 0] : vector<2x2xf32> -> vector<2x2xf32>
    %c0_24 = arith.constant 0 : index
    %c0_25 = arith.constant 0 : index
    %42 = vector.load %arg6[%c0_24, %c0_25] : memref<2x2xf32, #tpu.memory_space<vmem>>, vector<2x2xf32>
    tpu.vector_store %arg6[%c0_24, %c0_25], %41 {strides = array<i32>} : memref<2x2xf32, #tpu.memory_space<vmem>>, vector<2x2xf32>,
    return
  }
  func.func @transform_0(%arg0: i32) -> (i32, i32) {
    %c0_i32 = arith.constant 0 : i32
    %c0_i32_0 = arith.constant 0 : i32
    return %arg0, %c0_i32 : i32, i32
  }
  func.func @transform_1(%arg0: i32) -> (i32, i32) {
    %c0_i32 = arith.constant 0 : i32
    %c0_i32_0 = arith.constant 0 : i32
    %c0_i32_1 = arith.constant 0 : i32
    return %c0_i32, %c0_i32_0 : i32, i32
  }
  func.func @transform_2(%arg0: i32) -> (i32, i32) {
    %c0_i32 = arith.constant 0 : i32
    %c0_i32_0 = arith.constant 0 : i32
    %c0_i32_1 = arith.constant 0 : i32
    return %c0_i32, %c0_i32_0 : i32, i32
  }
  func.func @transform_3(%arg0: i32) -> (i32, i32) {
    %c0_i32 = arith.constant 0 : i32
    %c0_i32_0 = arith.constant 0 : i32
    %c0_i32_1 = arith.constant 0 : i32
    return %c0_i32, %c0_i32_0 : i32, i32
  }
  func.func @transform_4(%arg0: i32) -> (i32, i32) {
    %c0_i32 = arith.constant 0 : i32
    %c0_i32_0 = arith.constant 0 : i32
    %c0_i32_1 = arith.constant 0 : i32
    return %c0_i32, %c0_i32_0 : i32, i32
  }
  func.func @transform_5(%arg0: i32) -> (i32, i32) {
    %c0_i32 = arith.constant 0 : i32
    %c0_i32_0 = arith.constant 0 : i32
    return %c0_i32, %arg0 : i32, i32
  }
}

</mosaic_0001>

<llo_original>
// kernel: mlp_forward.1
$region0: #{mlp_forward.1}
  #allocation0 [shape = 'u32[]', space=smem, size = 0x4, offset = 0x4, fixed_abs, tag = 'smem constant byte address 0x4 - core index']
  #allocation1 [shape = 'u32[72,128]{1,0:T(1,128)}', space=vmem, size = 0x9000, scoped, tag = 'internal scratch']
  %s0 = inlined_call_operand.vmem [shape: f32[2,128], index: 0, kind: input, shape index: {}]
  %s1 = inlined_call_operand.vmem [shape: bf16[128,256], index: 1, kind: input, shape index: {}]
  %s2 = inlined_call_operand.vmem [shape: bf16[256,64], index: 2, kind: input, shape index: {}]
  %s3 = inlined_call_operand.vmem [shape: f32[80,8], index: 3, kind: input, shape index: {}]
  %s4 = inlined_call_operand.vmem [shape: f32[4,256], index: 4, kind: input, shape index: {}]
  %s5 = inlined_call_operand.vmem [shape: f32[2,2], index: 5, kind: output, shape index: {}]
  %s6 = sld [smem:[#allocation0]]
  $region30: #{mlp_forward.1} parent=0
    _
  %s8 = ssub.s32 1, %s6
  %s9 = scalar_select 0, %s8, %s6
  // Predicated region
  $region2: #{mlp_forward.1} parent=0 // pred_check
    _
  $region3: #{mlp_forward.1} parent=0 // pred_check_branch
    %11 = sbr.rel (0) target = $region5
  $region4: #{mlp_forward.1} parent=0 // pred_region
    _
  $region5: #{mlp_forward.1} parent=0 // pred_fallthru
    _
  // Predicated region
  $region6: #{mlp_forward.1} parent=0 // pred_check
    _
  $region7: #{mlp_forward.1} parent=0 // pred_check_branch
    %13 = sbr.rel (0) target = $region9
  $region8: #{mlp_forward.1} parent=0 // pred_region
    _
  $region9: #{mlp_forward.1} parent=0 // pred_fallthru
    _
  // Predicated region
  $region10: #{mlp_forward.1} parent=0 // pred_check
    _
  $region11: #{mlp_forward.1} parent=0 // pred_check_branch
    %15 = sbr.rel (0) target = $region13
  $region12: #{mlp_forward.1} parent=0 // pred_region
    _
  $region13: #{mlp_forward.1} parent=0 // pred_fallthru
    _
  // Predicated region
  $region14: #{mlp_forward.1} parent=0 // pred_check
    _
  $region15: #{mlp_forward.1} parent=0 // pred_check_branch
    %17 = sbr.rel (0) target = $region17
  $region16: #{mlp_forward.1} parent=0 // pred_region
    _
  $region17: #{mlp_forward.1} parent=0 // pred_fallthru
    _
  // Predicated region
  $region18: #{mlp_forward.1} parent=0 // pred_check
    _
  $region19: #{mlp_forward.1} parent=0 // pred_check_branch
    %19 = sbr.rel (0) target = $region21
  $region20: #{mlp_forward.1} parent=0 // pred_region
    _
  $region21: #{mlp_forward.1} parent=0 // pred_fallthru
    _
  %v20 = vld [vmem:[%s0] sm:$0x3]
  %v21 = vpack.c.bf16 %v20, %v20
  %v22 = vld [vmem:[%s1] sm:$0xff]
  %v23 = vld [vmem:[%s1 + $0x8] sm:$0xff]
  %v24 = vld [vmem:[%s1 + $0x10] sm:$0xff]
  %v25 = vld [vmem:[%s1 + $0x18] sm:$0xff]
  %v26 = vld [vmem:[%s1 + $0x20] sm:$0xff]
  %v27 = vld [vmem:[%s1 + $0x28] sm:$0xff]
  %v28 = vld [vmem:[%s1 + $0x30] sm:$0xff]
  %v29 = vld [vmem:[%s1 + $0x38] sm:$0xff]
  %v30 = vld [vmem:[%s1 + $0x40] sm:$0xff]
  %v31 = vld [vmem:[%s1 + $0x48] sm:$0xff]
  %v32 = vld [vmem:[%s1 + $0x50] sm:$0xff]
  %v33 = vld [vmem:[%s1 + $0x58] sm:$0xff]
  %v34 = vld [vmem:[%s1 + $0x60] sm:$0xff]
  %v35 = vld [vmem:[%s1 + $0x68] sm:$0xff]
  %v36 = vld [vmem:[%s1 + $0x70] sm:$0xff]
  %v37 = vld [vmem:[%s1 + $0x78] sm:$0xff]
  %v38 = vld [vmem:[%s4] ss:$4 sm:$0x3]
  %v40 = vperm.slane %v38, 0
  %v41 = vperm.slane %v38, 1
  %v60 = vunpack.c.l.b16 %v22
  %v61 = vunpack.c.h.b16 %v22
  %v62 = vunpack.c.l.b16 %v23
  %v63 = vunpack.c.h.b16 %v23
  %v64 = vunpack.c.l.b16 %v24
  %v65 = vunpack.c.h.b16 %v24
  %v66 = vunpack.c.l.b16 %v25
  %v67 = vunpack.c.h.b16 %v25
  %v68 = vunpack.c.l.b16 %v26
  %v69 = vunpack.c.h.b16 %v26
  %v70 = vunpack.c.l.b16 %v27
  %v71 = vunpack.c.h.b16 %v27
  %v72 = vunpack.c.l.b16 %v28
  %v73 = vunpack.c.h.b16 %v28
  %v74 = vunpack.c.l.b16 %v29
  %v75 = vunpack.c.h.b16 %v29
  %v76 = vunpack.c.l.b16 %v30
  %v77 = vunpack.c.h.b16 %v30
  %v78 = vunpack.c.l.b16 %v31
  %v79 = vunpack.c.h.b16 %v31
  %v80 = vunpack.c.l.b16 %v32
  %v81 = vunpack.c.h.b16 %v32
  %v82 = vunpack.c.l.b16 %v33
  %v83 = vunpack.c.h.b16 %v33
  %v84 = vunpack.c.l.b16 %v34
  %v85 = vunpack.c.h.b16 %v34
  %v86 = vunpack.c.l.b16 %v35
  %v87 = vunpack.c.h.b16 %v35
  %v88 = vunpack.c.l.b16 %v36
  %v89 = vunpack.c.h.b16 %v36
  %v90 = vunpack.c.l.b16 %v37
  %v91 = vunpack.c.h.b16 %v37
  %v92 = vpack.c.b16 %v62, %v60
  %v93 = vpack.c.b16 %v63, %v61
  %v94 = vpack.c.b16 %v66, %v64
  %v95 = vpack.c.b16 %v67, %v65
  %v96 = vpack.c.b16 %v70, %v68
  %v97 = vpack.c.b16 %v71, %v69
  %v98 = vpack.c.b16 %v74, %v72
  %v99 = vpack.c.b16 %v75, %v73
  %v100 = vpack.c.b16 %v78, %v76
  %v101 = vpack.c.b16 %v79, %v77
  %v102 = vpack.c.b16 %v82, %v80
  %v103 = vpack.c.b16 %v83, %v81
  %v104 = vpack.c.b16 %v86, %v84
  %v105 = vpack.c.b16 %v87, %v85
  %v106 = vpack.c.b16 %v90, %v88
  %v107 = vpack.c.b16 %v91, %v89
  %124 = vmatpush.bf16.msra.mxu0 %v106
  %125 = vmatpush.bf16.msra.mxu0 %v104
  %126 = vmatpush.bf16.msra.mxu0 %v102
  %127 = vmatpush.bf16.msra.mxu0 %v100
  %128 = vmatpush.bf16.msra.mxu0 %v98
  %129 = vmatpush.bf16.msra.mxu0 %v96
  %130 = vmatpush.bf16.msra.mxu0 %v94
  %131 = vmatpush.bf16.msra.mxu0 %v92
  %132 = vmatmul.bf16.gmra.mxu0 %v21
  %v133 = vpop.f32.mrf.mxu0
  %v134 = vadd.f32 %v40, %v133
  %v135 = vpop.f32.mrf.mxu0
  %136 = vdwg.mxu0
  %137 = vmatpush.bf16.msra.mxu0 %v107
  %138 = vmatpush.bf16.msra.mxu0 %v105
  %139 = vmatpush.bf16.msra.mxu0 %v103
  %140 = vmatpush.bf16.msra.mxu0 %v101
  %141 = vmatpush.bf16.msra.mxu0 %v99
  %142 = vmatpush.bf16.msra.mxu0 %v97
  %143 = vmatpush.bf16.msra.mxu0 %v95
  %144 = vmatpush.bf16.msra.mxu0 %v93
  %145 = vmatmul.bf16.gmra.mxu0 %v21
  %v146 = vpop.f32.mrf.mxu0
  %v147 = vadd.f32 %v41, %v146
  %v148 = vpop.f32.mrf.mxu0
  %149 = vdwg.mxu0
  %vm150 = vcmp.ge.f32.partialorder %v134, 0.0
  %vm151 = vcmp.ge.f32.partialorder %v147, 0.0
  %v152 = vmul.f32 %v134, 0.2
  %v153 = vmul.f32 %v147, 0.2
  %v154 = vsel %vm150, %v134, %v152
  %v155 = vsel %vm151, %v147, %v153
  %v156 = vpack.c.bf16 %v154, %v154
  %v157 = vpack.c.bf16 %v155, %v155
  %v158 = vld [vmem:[%s2] sm:$0xf]
  %v159 = vld [vmem:[%s2 + $0x4] sm:$0xf]
  %v160 = vld [vmem:[%s2 + $0x8] sm:$0xf]
  %v161 = vld [vmem:[%s2 + $0xc] sm:$0xf]
  %v162 = vld [vmem:[%s2 + $0x10] sm:$0xf]
  %v163 = vld [vmem:[%s2 + $0x14] sm:$0xf]
  %v164 = vld [vmem:[%s2 + $0x18] sm:$0xf]
  %v165 = vld [vmem:[%s2 + $0x1c] sm:$0xf]
  %v166 = vld [vmem:[%s2 + $0x20] sm:$0xf]
  %v167 = vld [vmem:[%s2 + $0x24] sm:$0xf]
  %v168 = vld [vmem:[%s2 + $0x28] sm:$0xf]
  %v169 = vld [vmem:[%s2 + $0x2c] sm:$0xf]
  %v170 = vld [vmem:[%s2 + $0x30] sm:$0xf]
  %v171 = vld [vmem:[%s2 + $0x34] sm:$0xf]
  %v172 = vld [vmem:[%s2 + $0x38] sm:$0xf]
  %v173 = vld [vmem:[%s2 + $0x3c] sm:$0xf]
  %v174 = vld [vmem:[%s2 + $0x40] sm:$0xf]
  %v175 = vld [vmem:[%s2 + $0x44] sm:$0xf]
  %v176 = vld [vmem:[%s2 + $0x48] sm:$0xf]
  %v177 = vld [vmem:[%s2 + $0x4c] sm:$0xf]
  %v178 = vld [vmem:[%s2 + $0x50] sm:$0xf]
  %v179 = vld [vmem:[%s2 + $0x54] sm:$0xf]
  %v180 = vld [vmem:[%s2 + $0x58] sm:$0xf]
  %v181 = vld [vmem:[%s2 + $0x5c] sm:$0xf]
  %v182 = vld [vmem:[%s2 + $0x60] sm:$0xf]
  %v183 = vld [vmem:[%s2 + $0x64] sm:$0xf]
  %v184 = vld [vmem:[%s2 + $0x68] sm:$0xf]
  %v185 = vld [vmem:[%s2 + $0x6c] sm:$0xf]
  %v186 = vld [vmem:[%s2 + $0x70] sm:$0xf]
  %v187 = vld [vmem:[%s2 + $0x74] sm:$0xf]
  %v188 = vld [vmem:[%s2 + $0x78] sm:$0xf]
  %v189 = vld [vmem:[%s2 + $0x7c] sm:$0xf]
  %v190 = vld [vmem:[%s4 + $0x1] sm:$0x1]
  %v191 = vperm.slane %v190, 0
  %v224 = vunpack.c.l.b16 %v158
  %v225 = vunpack.c.l.b16 %v159
  %v226 = vunpack.c.l.b16 %v160
  %v227 = vunpack.c.l.b16 %v161
  %v228 = vunpack.c.l.b16 %v162
  %v229 = vunpack.c.l.b16 %v163
  %v230 = vunpack.c.l.b16 %v164
  %v231 = vunpack.c.l.b16 %v165
  %v232 = vunpack.c.l.b16 %v166
  %v233 = vunpack.c.l.b16 %v167
  %v234 = vunpack.c.l.b16 %v168
  %v235 = vunpack.c.l.b16 %v169
  %v236 = vunpack.c.l.b16 %v170
  %v237 = vunpack.c.l.b16 %v171
  %v238 = vunpack.c.l.b16 %v172
  %v239 = vunpack.c.l.b16 %v173
  %v240 = vunpack.c.l.b16 %v174
  %v241 = vunpack.c.l.b16 %v175
  %v242 = vunpack.c.l.b16 %v176
  %v243 = vunpack.c.l.b16 %v177
  %v244 = vunpack.c.l.b16 %v178
  %v245 = vunpack.c.l.b16 %v179
  %v246 = vunpack.c.l.b16 %v180
  %v247 = vunpack.c.l.b16 %v181
  %v248 = vunpack.c.l.b16 %v182
  %v249 = vunpack.c.l.b16 %v183
  %v250 = vunpack.c.l.b16 %v184
  %v251 = vunpack.c.l.b16 %v185
  %v252 = vunpack.c.l.b16 %v186
  %v253 = vunpack.c.l.b16 %v187
  %v254 = vunpack.c.l.b16 %v188
  %v255 = vunpack.c.l.b16 %v189
  %v256 = vpack.c.b16 %v225, %v224
  %v257 = vpack.c.b16 %v227, %v226
  %v258 = vpack.c.b16 %v229, %v228
  %v259 = vpack.c.b16 %v231, %v230
  %v260 = vpack.c.b16 %v233, %v232
  %v261 = vpack.c.b16 %v235, %v234
  %v262 = vpack.c.b16 %v237, %v236
  %v263 = vpack.c.b16 %v239, %v238
  %v264 = vpack.c.b16 %v241, %v240
  %v265 = vpack.c.b16 %v243, %v242
  %v266 = vpack.c.b16 %v245, %v244
  %v267 = vpack.c.b16 %v247, %v246
  %v268 = vpack.c.b16 %v249, %v248
  %v269 = vpack.c.b16 %v251, %v250
  %v270 = vpack.c.b16 %v253, %v252
  %v271 = vpack.c.b16 %v255, %v254
  %288 = vmatpush.bf16.msra.mxu0 %v263
  %289 = vmatpush.bf16.msra.mxu0 %v262
  %290 = vmatpush.bf16.msra.mxu0 %v261
  %291 = vmatpush.bf16.msra.mxu0 %v260
  %292 = vmatpush.bf16.msra.mxu0 %v259
  %293 = vmatpush.bf16.msra.mxu0 %v258
  %294 = vmatpush.bf16.msra.mxu0 %v257
  %295 = vmatpush.bf16.msra.mxu0 %v256
  %296 = vmatmul.bf16.gmra.mxu0 %v156
  %v297 = vpop.f32.mrf.mxu0
  %v298 = vadd.f32 %v191, %v297
  %v299 = vpop.f32.mrf.mxu0
  %300 = vdwg.mxu0
  %301 = vmatpush.bf16.msra.mxu0 %v271
  %302 = vmatpush.bf16.msra.mxu0 %v270
  %303 = vmatpush.bf16.msra.mxu0 %v269
  %304 = vmatpush.bf16.msra.mxu0 %v268
  %305 = vmatpush.bf16.msra.mxu0 %v267
  %306 = vmatpush.bf16.msra.mxu0 %v266
  %307 = vmatpush.bf16.msra.mxu0 %v265
  %308 = vmatpush.bf16.msra.mxu0 %v264
  %309 = vmatmul.bf16.gmra.mxu0 %v157
  %v310 = vpop.f32.mrf.mxu0
  %v311 = vadd.f32 %v298, %v310
  %v312 = vpop.f32.mrf.mxu0
  %313 = vdwg.mxu0
  %vm314 = vcmp.ge.f32.partialorder %v311, 0.0
  %v315 = vmul.f32 %v311, 0.2
  %v316 = vsel %vm314, %v311, %v315
  %v317 = vld [vmem:[%s3] sm:$0xff]
  %v318 = vld [vmem:[%s3 + $0x8] sm:$0xff]
  %v319 = vld [vmem:[%s3 + $0x10] sm:$0xff]
  %v320 = vld [vmem:[%s3 + $0x18] sm:$0xff]
  %v321 = vld [vmem:[%s3 + $0x20] sm:$0xff]
  %v322 = vld [vmem:[%s3 + $0x28] sm:$0xff]
  %v323 = vld [vmem:[%s3 + $0x30] sm:$0xff]
  %v324 = vld [vmem:[%s3 + $0x38] sm:$0xff]
  %vm325 = vcmask 523264
  %v327 = vsel %vm325, %v316, 0
  %329 = vmatpush.msra.mxu0 0.0
  %330 = vmatpush.msra.mxu0 0.0
  %331 = vmatpush.msra.mxu0 0.0
  %332 = vmatpush.msra.mxu0 0.0
  %333 = vmatpush.msra.mxu0 0.0
  %334 = vmatpush.msra.mxu0 0.0
  %335 = vmatpush.msra.mxu0 0.0
  %336 = vmatpush.msra.mxu0 0.0
  %337 = vmatpush.msra.mxu0 %v324
  %338 = vmatpush.msra.mxu0 %v323
  %339 = vmatpush.msra.mxu0 %v322
  %340 = vmatpush.msra.mxu0 %v321
  %341 = vmatpush.msra.mxu0 %v320
  %342 = vmatpush.msra.mxu0 %v319
  %343 = vmatpush.msra.mxu0 %v318
  %344 = vmatpush.msra.mxu0 %v317
  %345 = vmatmul.f32.gmra.mxu0 %v327
  %v346 = vpop.f32.mrf.mxu0
  %v347 = vadd.f32 0.0, %v346
  %348 = vdwg.mxu0
  %v349 = vld [vmem:[%s3 + $0x40] sm:$0xff]
  %v350 = vld [vmem:[%s4 + $0x2] sm:$0x1]
  %v351 = vperm.slane %v350, 0
  %vm352 = vcmask 64512
  %v354 = vsel %vm352, %v347, 0
  %356 = vmatpush.msra.mxu0 0.0
  %357 = vmatpush.msra.mxu0 0.0
  %358 = vmatpush.msra.mxu0 0.0
  %359 = vmatpush.msra.mxu0 0.0
  %360 = vmatpush.msra.mxu0 0.0
  %361 = vmatpush.msra.mxu0 0.0
  %362 = vmatpush.msra.mxu0 0.0
  %363 = vmatpush.msra.mxu0 0.0
  %364 = vmatpush.msra.mxu0 0.0
  %365 = vmatpush.msra.mxu0 0.0
  %366 = vmatpush.msra.mxu0 0.0
  %367 = vmatpush.msra.mxu0 0.0
  %368 = vmatpush.msra.mxu0 0.0
  %369 = vmatpush.msra.mxu0 0.0
  %370 = vmatpush.msra.mxu0 0.0
  %371 = vmatpush.msra.mxu0 %v349
  %372 = vmatmul.f32.gmra.mxu0 %v354
  %v373 = vpop.f32.mrf.mxu0
  %v374 = vadd.f32 %v351, %v373
  %375 = vdwg.mxu0
  %vm376 = vcmp.ge.f32.partialorder %v374, 0.0
  %v377 = vmul.f32 %v374, 0.2
  %v378 = vsel %vm376, %v374, %v377
  %v379 = vld [vmem:[%s3 + $0x48] sm:$0xff]
  %v381 = vsel %vm352, %v378, 0
  %383 = vmatpush.msra.mxu0 0.0
  %384 = vmatpush.msra.mxu0 0.0
  %385 = vmatpush.msra.mxu0 0.0
  %386 = vmatpush.msra.mxu0 0.0
  %387 = vmatpush.msra.mxu0 0.0
  %388 = vmatpush.msra.mxu0 0.0
  %389 = vmatpush.msra.mxu0 0.0
  %390 = vmatpush.msra.mxu0 0.0
  %391 = vmatpush.msra.mxu0 0.0
  %392 = vmatpush.msra.mxu0 0.0
  %393 = vmatpush.msra.mxu0 0.0
  %394 = vmatpush.msra.mxu0 0.0
  %395 = vmatpush.msra.mxu0 0.0
  %396 = vmatpush.msra.mxu0 0.0
  %397 = vmatpush.msra.mxu0 0.0
  %398 = vmatpush.msra.mxu0 %v379
  %399 = vmatmul.f32.gmra.mxu0 %v381
  %v400 = vpop.f32.mrf.mxu0
  %v401 = vadd.f32 0.0, %v400
  %402 = vdwg.mxu0
  %v403 = vld [vmem:[%s4 + $0x3] sm:$0x1]
  %v404 = vperm.slane %v403, 0
  %v405 = vadd.f32 %v401, %v404
  %406 = vxpose.xlu0.b32.start [1/16] %v405, 128
  %407 = vxpose.xlu0.b32.cont [2/16] 0.0, 128
  %408 = vxpose.xlu0.b32.cont [3/16] 0.0, 128
  %409 = vxpose.xlu0.b32.cont [4/16] 0.0, 128
  %410 = vxpose.xlu0.b32.cont [5/16] 0.0, 128
  %411 = vxpose.xlu0.b32.cont [6/16] 0.0, 128
  %412 = vxpose.xlu0.b32.cont [7/16] 0.0, 128
  %413 = vxpose.xlu0.b32.cont [8/16] 0.0, 128
  %414 = vxpose.xlu0.b32.cont [9/16] 0.0, 128
  %415 = vxpose.xlu0.b32.cont [10/16] 0.0, 128
  %416 = vxpose.xlu0.b32.cont [11/16] 0.0, 128
  %417 = vxpose.xlu0.b32.cont [12/16] 0.0, 128
  %418 = vxpose.xlu0.b32.cont [13/16] 0.0, 128
  %419 = vxpose.xlu0.b32.cont [14/16] 0.0, 128
  %420 = vxpose.xlu0.b32.cont [15/16] 0.0, 128
  %421 = vxpose.xlu0.b32.end [16/16] 0.0, 128
  %v422 = vpop.trf.xlu0
  %v423 = vpop.trf.xlu0
  %v424 = vpop.trf.xlu0
  %v425 = vpop.trf.xlu0
  %v426 = vpop.trf.xlu0
  %v427 = vpop.trf.xlu0
  %v428 = vpop.trf.xlu0
  %v429 = vpop.trf.xlu0
  %v430 = vpop.trf.xlu0
  %v431 = vpop.trf.xlu0
  %v432 = vpop.trf.xlu0
  %v433 = vpop.trf.xlu0
  %v434 = vpop.trf.xlu0
  %v435 = vpop.trf.xlu0
  %v436 = vpop.trf.xlu0
  %v437 = vpop.trf.xlu0
  %vm438 = vcmask 9216
  %439 = vst.msk [vmem:[%s5] sm:$0x3] %vm438, %v422
  // Predicated region
  $region22: #{mlp_forward.1} parent=0 // pred_check
    _
  $region23: #{mlp_forward.1} parent=0 // pred_check_branch
    %441 = sbr.rel (0) target = $region25
  $region24: #{mlp_forward.1} parent=0 // pred_region
    _
  $region25: #{mlp_forward.1} parent=0 // pred_fallthru
    _
  // Predicated region
  $region26: #{mlp_forward.1} parent=0 // pred_check
    _
  $region27: #{mlp_forward.1} parent=0 // pred_check_branch
    %443 = sbr.rel (0) target = $region29
  $region28: #{mlp_forward.1} parent=0 // pred_region
    _
  $region29: #{mlp_forward.1} parent=0 // pred_fallthru
    _

</llo_original>
